<compile_context>
chip_gen: v7x
topology: tpu7x:2x2x1
jax: 0.10.0
libtpu: 0.0.40
codegen_flags: <defaults>
</compile_context>

<pallas_src>
import jax
import jax.numpy as jnp
import numpy as np
from jax.experimental import pallas as pl
from jax.experimental.pallas import tpu as pltpu


def units_train_kernel(ids_ref, tgt_ref, table_ref, pos_ref, w_ref, b_ref,
                       logits_ref, loss_ref):
    Lb, Vp = logits_ref.shape

    ids = ids_ref[...]                                              # (Lb, 1) int32
    vocab_iota = jax.lax.broadcasted_iota(jnp.int32, (Lb, Vp), 1)   # (Lb, Vp)

    # --- pix2seq_embed: embedding lookup as one-hot matmul on the MXU ---
    # (bf16 one-hot is exact; padded vocab rows of the table are zero and are
    # never selected because ids < V).
    onehot = (ids == vocab_iota).astype(jnp.bfloat16)               # (Lb, Vp)
    emb = jnp.dot(onehot, table_ref[...],
                  preferred_element_type=jnp.float32)               # (Lb, D) f32

    # --- decoder stand-in: add positional encoding (see TODO above) ---
    dec = emb + pos_ref[...].astype(jnp.float32)                    # (Lb, D) f32

    # --- pix2seq_head: bf16 MXU matmul, f32 accumulate, f32 bias add ---
    # Padded vocab lanes carry a -1e9 bias so they vanish in the softmax.
    logits = jnp.dot(dec.astype(jnp.bfloat16), w_ref[...],
                     preferred_element_type=jnp.float32) + b_ref[...]
    logits_ref[...] = logits                                        # (Lb, Vp)

    # --- loss_criterion: per-token softmax cross-entropy in f32 ---
    tgt = tgt_ref[...]                                              # (Lb, 1) int32
    m = jnp.max(logits, axis=-1, keepdims=True)                     # (Lb, 1)
    lse = m + jnp.log(jnp.sum(jnp.exp(logits - m), axis=-1, keepdims=True))
    # No second (Lb, Vp) one-hot temporary: masked select + lane reduce (XLU).
    tgt_logit = jnp.sum(jnp.where(vocab_iota == tgt, logits, 0.0),
                        axis=-1, keepdims=True)                     # (Lb, 1)
    loss_ref[...] = lse - tgt_logit


def _round_up(x, m):
    return (x + m - 1) // m * m


def _pick_l_block(L, target=512):
    """Largest seq-block that divides L, is a sublane multiple (or == L)."""
    if L <= target:
        return L
    for blk in range(target, 7, -1):
        if L % blk == 0 and blk % 8 == 0:
            return blk
    return L


def units_decoder_forward_train(ids, targets, embed_table, pos, head_w, head_b):
    """Pallas implementation of UnitsDecoder.forward_train's numeric core.

    ids:         (N, L) int32   -- batch.units.units_inputs
    targets:     (N, L) int32   -- batch.units.units_targets
    embed_table: (V, D) float32 -- pix2seq_embed.weight
    pos:         (L, D) float32 -- pix2seq_pos (decoder_length == L here)
    head_w:      (D, V) float32 -- pix2seq_head.weight.T
    head_b:      (V,)   float32 -- pix2seq_head.bias
    """
    N, L = ids.shape
    V, D = embed_table.shape
    T = N * L

    Vp = _round_up(V, 128)                 # lane-dense vocab axis
    l_blk = _pick_l_block(L)
    num_l_blocks = L // l_blk

    # ---- wrapper-side layout / dtype prep ----
    neg = jnp.float32(-1e9)
    table_p = jnp.zeros((Vp, D), jnp.bfloat16).at[:V, :].set(
        embed_table.astype(jnp.bfloat16))
    pos_b = pos.astype(jnp.bfloat16)                                 # (L, D)
    w_p = jnp.zeros((D, Vp), jnp.bfloat16).at[:, :V].set(
        head_w.astype(jnp.bfloat16))
    b_p = jnp.full((1, Vp), neg, jnp.float32).at[0, :V].set(
        head_b.astype(jnp.float32))

    ids3 = ids.reshape(N, L, 1).astype(jnp.int32)
    tgt3 = targets.reshape(N, L, 1).astype(jnp.int32)

    # ---- VMEM budget (resident weights + double-buffered block IO + temps) ----
    resident = Vp * D * 2 + D * Vp * 2 + Vp * 4
    per_block_io = l_blk * (4 + 4 + D * 2 + Vp * 4 + 4)
    temps = 6 * l_blk * Vp * 4
    est = 2 * resident + 2 * per_block_io + temps
    vmem_limit = int(min(64 * 2**20, max(32 * 2**20, 2 * est)))

    grid = (N, num_l_blocks)

    logits_p, loss_tok = pl.pallas_call(
        units_train_kernel,
        grid=grid,
        out_shape=(
            jax.ShapeDtypeStruct((N, L, Vp), jnp.float32),
            jax.ShapeDtypeStruct((N, L, 1), jnp.float32),
        ),
        in_specs=[
            pl.BlockSpec((None, l_blk, 1), lambda n, l: (n, l, 0)),   # ids
            pl.BlockSpec((None, l_blk, 1), lambda n, l: (n, l, 0)),   # targets
            pl.BlockSpec((Vp, D), lambda n, l: (0, 0)),               # embed table (resident)
            pl.BlockSpec((l_blk, D), lambda n, l: (l, 0)),            # pos (no batch tile)
            pl.BlockSpec((D, Vp), lambda n, l: (0, 0)),               # head weight (resident)
            pl.BlockSpec((1, Vp), lambda n, l: (0, 0)),               # head bias
        ],
        out_specs=(
            pl.BlockSpec((None, l_blk, Vp), lambda n, l: (n, l, 0)),  # logits
            pl.BlockSpec((None, l_blk, 1), lambda n, l: (n, l, 0)),   # per-token loss
        ),
        compiler_params=pltpu.CompilerParams(
            dimension_semantics=("parallel", "parallel"),
            vmem_limit_bytes=vmem_limit,
        ),
    )(ids3, tgt3, table_p, pos_b, w_p, b_p)

    total_loss = jnp.sum(loss_tok) / T
    return {
        "total_loss": total_loss,
        "output_logit": logits_p[:, :, :V],
    }


def _reference(ids, targets, embed_table, pos, head_w, head_b):
    """Pure-JAX reference mirroring the kernel's bf16-weight / f32-accumulate
    numerics (PyTorch forward_train semantics with bf16 MXU inputs)."""
    N, L = ids.shape
    V, D = embed_table.shape
    tbl = embed_table.astype(jnp.bfloat16).astype(jnp.float32)
    posb = pos.astype(jnp.bfloat16).astype(jnp.float32)
    hw = head_w.astype(jnp.bfloat16)

    emb = jnp.take(tbl, ids, axis=0)                            # (N, L, D)
    dec = (emb + posb[None, :, :]).astype(jnp.bfloat16)         # decoder stand-in
    logits = jnp.dot(dec.reshape(-1, D), hw,
                     preferred_element_type=jnp.float32) + head_b
    logits = logits.reshape(N, L, V)

    flat = logits.reshape(-1, V)
    tgt = targets.reshape(-1)
    lse = jax.scipy.special.logsumexp(flat, axis=-1)
    tgt_logit = jnp.take_along_axis(flat, tgt[:, None], axis=-1)[:, 0]
    loss = jnp.mean(lse - tgt_logit)
    return logits, loss


if __name__ == "__main__":
    # Small shapes consistent with the module: batch=2, decoder_length=8,
    # dim=32, n_vocab=64.
    N, L, D, V = 2, 8, 32, 64

    key = jax.random.PRNGKey(0)
    k_ids, k_tgt, k_emb, k_pos, k_w, k_b = jax.random.split(key, 6)

    ids = jax.random.randint(k_ids, (N, L), 0, V, dtype=jnp.int32)
    targets = jax.random.randint(k_tgt, (N, L), 0, V, dtype=jnp.int32)

    # nn.Embedding(n_vocab, dim) -> (V, D); pix2seq_pos -> (L, D)*0.02;
    # nn.Linear(dim, n_vocab) weight stored transposed as (D, V) + bias (V,).
    embed_table = jax.random.normal(k_emb, (V, D), dtype=jnp.float32)
    pos = jax.random.normal(k_pos, (L, D), dtype=jnp.float32) * 0.02
    bound = 1.0 / np.sqrt(D)
    head_w = jax.random.uniform(k_w, (D, V), jnp.float32, -bound, bound)
    head_b = jax.random.uniform(k_b, (V,), jnp.float32, -bound, bound)

    out = units_decoder_forward_train(ids, targets, embed_table, pos,
                                      head_w, head_b)
    out = jax.block_until_ready(out)

    ref_logits, ref_loss = _reference(ids, targets, embed_table, pos,
                                      head_w, head_b)
    np.testing.assert_allclose(np.asarray(out["output_logit"]),
                               np.asarray(ref_logits), atol=1e-3, rtol=1e-3)
    np.testing.assert_allclose(np.asarray(out["total_loss"]),
                               np.asarray(ref_loss), atol=1e-3, rtol=1e-3)

    print("KERNEL_OK")
</pallas_src>

<mosaic_0001>
module attributes {stable_mosaic.version = 11 : i64} {
  func.func @units_train_kernel(%arg0: i32, %arg1: i32, %arg2: memref<1x8x1xi32, #tpu.memory_space<vmem>>, %arg3: memref<1x8x1xi32, #tpu.memory_space<vmem>>, %arg4: memref<128x32xbf16, #tpu.memory_space<vmem>>, %arg5: memref<8x32xbf16, #tpu.memory_space<vmem>>, %arg6: memref<32x128xbf16, #tpu.memory_space<vmem>>, %arg7: memref<1x128xf32, #tpu.memory_space<vmem>>, %arg8: memref<1x8x128xf32, #tpu.memory_space<vmem>>, %arg9: memref<1x8x1xf32, #tpu.memory_space<vmem>>) attributes {dimension_semantics = [#tpu.dimension_semantics<parallel>, #tpu.dimension_semantics<parallel>], iteration_bounds = array<i64: 2, 1>, scalar_prefetch = 0 : i64, scratch_operands = 0 : i64, tpu.core_type = #tpu.core_type<tc>, window_params = [{transform_indices = @transform_0, window_bounds = array<i64: 1, 8, 1>}, {transform_indices = @transform_1, window_bounds = array<i64: 1, 8, 1>}, {pipeline_mode = #tpu.pipeline_mode<synchronous>, transform_indices = @transform_2, window_bounds = array<i64: 128, 32>}, {transform_indices = @transform_3, window_bounds = array<i64: 8, 32>}, {pipeline_mode = #tpu.pipeline_mode<synchronous>, transform_indices = @transform_4, window_bounds = array<i64: 32, 128>}, {pipeline_mode = #tpu.pipeline_mode<synchronous>, transform_indices = @transform_5, window_bounds = array<i64: 1, 128>}, {transform_indices = @transform_6, window_bounds = array<i64: 1, 8, 128>}, {transform_indices = @transform_7, window_bounds = array<i64: 1, 8, 1>}]} {
    %c0 = arith.constant 0 : index
    %c0_0 = arith.constant 0 : index
    %c0_1 = arith.constant 0 : index
    %0 = vector.load %arg2[%c0, %c0_0, %c0_1] : memref<1x8x1xi32, #tpu.memory_space<vmem>>, vector<1x8x1xi32>
    %1 = vector.shape_cast %0 : vector<1x8x1xi32> to vector<8x1xi32>
    %2 = tpu.iota {dimensions = array<i32: 1>} : vector<8x128xi32>
    %3 = vector.broadcast %1 : vector<8x1xi32> to vector<8x128xi32>
    %4 = arith.cmpi eq, %3, %2 : vector<8x128xi32>
    %5 = arith.extui %4 : vector<8x128xi1> to vector<8x128xi32>
    %6 = arith.sitofp %5 : vector<8x128xi32> to vector<8x128xf32>
    %7 = arith.truncf %6 : vector<8x128xf32> to vector<8x128xbf16>
    %c0_2 = arith.constant 0 : index
    %c0_3 = arith.constant 0 : index
    %8 = vector.load %arg4[%c0_2, %c0_3] : memref<128x32xbf16, #tpu.memory_space<vmem>>, vector<128x32xbf16>
    %cst = arith.constant dense<0.000000e+00> : vector<8x32xf32>
    %9 = tpu.matmul %7, %8, %cst {dimension_numbers = #tpu.dot_dimension_numbers<[1], [0], [0], [1], [0, 0, 1, 1], [], []>} : vector<8x128xbf16>, vector<128x32xbf16>, vector<8x32xf32> -> vector<8x32xf32>
    %c0_4 = arith.constant 0 : index
    %c0_5 = arith.constant 0 : index
    %10 = vector.load %arg5[%c0_4, %c0_5] : memref<8x32xbf16, #tpu.memory_space<vmem>>, vector<8x32xbf16>
    %11 = arith.extf %10 : vector<8x32xbf16> to vector<8x32xf32>
    %12 = arith.addf %9, %11 : vector<8x32xf32>
    %13 = arith.truncf %12 : vector<8x32xf32> to vector<8x32xbf16>
    %c0_6 = arith.constant 0 : index
    %c0_7 = arith.constant 0 : index
    %14 = vector.load %arg6[%c0_6, %c0_7] : memref<32x128xbf16, #tpu.memory_space<vmem>>, vector<32x128xbf16>
    %cst_8 = arith.constant dense<0.000000e+00> : vector<8x128xf32>
    %15 = tpu.matmul %13, %14, %cst_8 {dimension_numbers = #tpu.dot_dimension_numbers<[1], [0], [0], [1], [0, 0, 1, 1], [], []>} : vector<8x32xbf16>, vector<32x128xbf16>, vector<8x128xf32> -> vector<8x128xf32>
    %c0_9 = arith.constant 0 : index
    %c0_10 = arith.constant 0 : index
    %16 = vector.load %arg7[%c0_9, %c0_10] : memref<1x128xf32, #tpu.memory_space<vmem>>, vector<1x128xf32>
    %17 = vector.broadcast %16 : vector<1x128xf32> to vector<8x128xf32>
    %18 = arith.addf %15, %17 : vector<8x128xf32>
    %c0_11 = arith.constant 0 : index
    %c0_12 = arith.constant 0 : index
    %c0_13 = arith.constant 0 : index
    %19 = vector.load %arg8[%c0_11, %c0_12, %c0_13] : memref<1x8x128xf32, #tpu.memory_space<vmem>>, vector<1x8x128xf32>
    %20 = vector.shape_cast %19 : vector<1x8x128xf32> to vector<8x128xf32>
    %21 = vector.shape_cast %18 : vector<8x128xf32> to vector<1x8x128xf32>
    tpu.vector_store %arg8[%c0_11, %c0_12, %c0_13], %21 {strides = array<i32>} : memref<1x8x128xf32, #tpu.memory_space<vmem>>, vector<1x8x128xf32>,
    %c0_14 = arith.constant 0 : index
    %c0_15 = arith.constant 0 : index
    %c0_16 = arith.constant 0 : index
    %22 = vector.load %arg3[%c0_14, %c0_15, %c0_16] : memref<1x8x1xi32, #tpu.memory_space<vmem>>, vector<1x8x1xi32>
    %23 = vector.shape_cast %22 : vector<1x8x1xi32> to vector<8x1xi32>
    %cst_17 = arith.constant dense<0xFF800000> : vector<8xf32>
    %24 = vector.multi_reduction <maximumf>, %18, %cst_17 [1] : vector<8x128xf32> to vector<8xf32>
    %25 = vector.shape_cast %24 : vector<8xf32> to vector<8x1xf32>
    %26 = vector.broadcast %25 : vector<8x1xf32> to vector<8x128xf32>
    %27 = arith.subf %18, %26 : vector<8x128xf32>
    %28 = math.exp %27 : vector<8x128xf32>
    %cst_18 = arith.constant dense<0.000000e+00> : vector<8xf32>
    %29 = vector.multi_reduction <add>, %28, %cst_18 [1] : vector<8x128xf32> to vector<8xf32>
    %30 = vector.shape_cast %29 : vector<8xf32> to vector<8x1xf32>
    %31 = math.log %30 : vector<8x1xf32>
    %32 = arith.addf %25, %31 : vector<8x1xf32>
    %33 = vector.broadcast %23 : vector<8x1xi32> to vector<8x128xi32>
    %34 = arith.cmpi eq, %2, %33 : vector<8x128xi32>
    %cst_19 = arith.constant 0.000000e+00 : f32
    %35 = vector.broadcast %cst_19 : f32 to vector<8x128xf32>
    %36 = arith.select %34, %18, %35 : vector<8x128xi1>, vector<8x128xf32>
    %cst_20 = arith.constant dense<0.000000e+00> : vector<8xf32>
    %37 = vector.multi_reduction <add>, %36, %cst_20 [1] : vector<8x128xf32> to vector<8xf32>
    %38 = vector.shape_cast %37 : vector<8xf32> to vector<8x1xf32>
    %39 = arith.subf %32, %38 : vector<8x1xf32>
    %c0_21 = arith.constant 0 : index
    %c0_22 = arith.constant 0 : index
    %c0_23 = arith.constant 0 : index
    %40 = vector.load %arg9[%c0_21, %c0_22, %c0_23] : memref<1x8x1xf32, #tpu.memory_space<vmem>>, vector<1x8x1xf32>
    %41 = vector.shape_cast %40 : vector<1x8x1xf32> to vector<8x1xf32>
    %42 = vector.shape_cast %39 : vector<8x1xf32> to vector<1x8x1xf32>
    tpu.vector_store %arg9[%c0_21, %c0_22, %c0_23], %42 {strides = array<i32>} : memref<1x8x1xf32, #tpu.memory_space<vmem>>, vector<1x8x1xf32>,
    return
  }
  func.func @transform_0(%arg0: i32, %arg1: i32) -> (i32, i32, i32) {
    %c0_i32 = arith.constant 0 : i32
    %c0_i32_0 = arith.constant 0 : i32
    return %arg0, %arg1, %c0_i32 : i32, i32, i32
  }
  func.func @transform_1(%arg0: i32, %arg1: i32) -> (i32, i32, i32) {
    %c0_i32 = arith.constant 0 : i32
    %c0_i32_0 = arith.constant 0 : i32
    return %arg0, %arg1, %c0_i32 : i32, i32, i32
  }
  func.func @transform_2(%arg0: i32, %arg1: i32) -> (i32, i32) {
    %c0_i32 = arith.constant 0 : i32
    %c0_i32_0 = arith.constant 0 : i32
    %c0_i32_1 = arith.constant 0 : i32
    return %c0_i32, %c0_i32_0 : i32, i32
  }
  func.func @transform_3(%arg0: i32, %arg1: i32) -> (i32, i32) {
    %c0_i32 = arith.constant 0 : i32
    %c0_i32_0 = arith.constant 0 : i32
    return %arg1, %c0_i32 : i32, i32
  }
  func.func @transform_4(%arg0: i32, %arg1: i32) -> (i32, i32) {
    %c0_i32 = arith.constant 0 : i32
    %c0_i32_0 = arith.constant 0 : i32
    %c0_i32_1 = arith.constant 0 : i32
    return %c0_i32, %c0_i32_0 : i32, i32
  }
  func.func @transform_5(%arg0: i32, %arg1: i32) -> (i32, i32) {
    %c0_i32 = arith.constant 0 : i32
    %c0_i32_0 = arith.constant 0 : i32
    %c0_i32_1 = arith.constant 0 : i32
    return %c0_i32, %c0_i32_0 : i32, i32
  }
  func.func @transform_6(%arg0: i32, %arg1: i32) -> (i32, i32, i32) {
    %c0_i32 = arith.constant 0 : i32
    %c0_i32_0 = arith.constant 0 : i32
    return %arg0, %arg1, %c0_i32 : i32, i32, i32
  }
  func.func @transform_7(%arg0: i32, %arg1: i32) -> (i32, i32, i32) {
    %c0_i32 = arith.constant 0 : i32
    %c0_i32_0 = arith.constant 0 : i32
    return %arg0, %arg1, %c0_i32 : i32, i32, i32
  }
}

</mosaic_0001>

<llo_original>
// kernel: tpu_custom_call.1
$region0: #{tpu_custom_call.1}
  #allocation0 [shape = 'u32[]', space=smem, size = 0x4, offset = 0x4, fixed_abs, tag = 'smem constant byte address 0x4 - core index']
  #allocation1 [shape = 'u32[144,128]{1,0:T(1,128)}', space=vmem, size = 0x12000, scoped, tag = 'internal scratch']
  %s0 = inlined_call_operand.vmem [shape: s32[2,8,1], index: 0, kind: input, shape index: {}]
  %s1 = inlined_call_operand.vmem [shape: s32[2,8,1], index: 1, kind: input, shape index: {}]
  %s2 = inlined_call_operand.vmem [shape: bf16[128,32], index: 2, kind: input, shape index: {}]
  %s3 = inlined_call_operand.vmem [shape: bf16[8,32], index: 3, kind: input, shape index: {}]
  %s4 = inlined_call_operand.vmem [shape: bf16[32,128], index: 4, kind: input, shape index: {}]
  %s5 = inlined_call_operand.vmem [shape: f32[1,128], index: 5, kind: input, shape index: {}]
  %s6 = inlined_call_operand.hbm [shape: f32[2,8,128], index: 6, kind: output, shape index: {0}]
  %s7 = inlined_call_operand.vmem [shape: f32[2,8,1], index: 7, kind: output, shape index: {1}]
  %8 = xla_tuple %s6, %s7
  %s9 = sld [smem:[#allocation0]]
  $region65: #{tpu_custom_call.1} parent=0
    _
  %s11 = ssub.s32 1, %s9
  %s12 = scalar_select 0, %s11, %s9
  $region1: #{tpu_custom_call.1} parent=0
    #allocation2 [shape = 'u8[8192]{0}', space=vmem, size = 0x2000, scoped, tag = 'output window, operand 0']
    #allocation3 [shape = 's32[2]{0}', space=sflag, size = 0x8, scoped, tag = 'scoped memory for tpu_custom_call.1']
    %13 = vsyncpa [#allocation3], 0
    %s14 = scalar_lea.sflag [#allocation3], 1
    %15 = vsyncpa %s14, 0
    loop: start=0, step=1, limit=4
    $region2: #{tpu_custom_call.1} parent=1 // loop_pre_header
      _
    $region3: #{tpu_custom_call.1} parent=1 // loop_header
      %s17 = sphi 0, %s21
      %p18 = scmp.ge.s32.totalorder %s17, 4
      %s24 = sphi 0, %s36
      %s25 = sphi 0, %s32
      %s26 = sphi 0, %s24
      %s27 = sphi 0, %s25
      %s28 = sphi 0, %s26
      %s29 = sphi 0, %s27
      %s41 = sphi 0, %s43
      %s44 = sphi 0, %s41
      %s45 = sphi 0, %s44
      %s61 = sphi 0, %s45
      %s69 = sphi 0, %s71
      %s72 = sphi 0, %s69
      %s73 = sphi 0, %s72
      %s89 = sphi 0, %s73
      %s93 = sphi 0, %s93
      %s95 = sphi 0, %s93
      %s96 = sphi 0, %s95
      %s110 = sphi 0, %s96
      %s116 = sphi 0, %s118
      %s119 = sphi 0, %s116
      %s120 = sphi 0, %s119
      %s136 = sphi 0, %s120
      %s140 = sphi 0, %s140
      %s142 = sphi 0, %s140
      %s143 = sphi 0, %s142
      %s157 = sphi 0, %s143
      %s161 = sphi 0, %s161
      %s163 = sphi 0, %s161
      %s164 = sphi 0, %s163
      %s178 = sphi 0, %s164
      %s186 = sphi 0, %s188
      %s189 = sphi 0, %s186
      %s190 = sphi 0, %s189
      %s206 = sphi 0, %s190
      %s214 = sphi 0, %s216
      %s217 = sphi 0, %s214
      %s218 = sphi 0, %s217
      %s234 = sphi 0, %s218
    $region4: #{tpu_custom_call.1} parent=1 // loop_header_branch
      %20 = sbr.rel (%p18) target = $region8
    $region5: #{tpu_custom_call.1} parent=1 // loop_body
      %s22 = ssub.s32 %s17, 1
      %s23 = ssub.s32 %s17, 2
      %s30 = sadd.s32 1, %s25
      %p31 = scmp.ge.s32.totalorder %s30, 1
      %s32 = scalar_select %p31, 0, %s30
      %s33 = sadd.s32 1, %s24
      %s34 = scalar_select %p31, %s33, %s24
      %p35 = scmp.ge.s32.totalorder %s34, 2
      %s36 = scalar_select %p35, 0, %s34
      %s37 = ssub.s32 %s24, %s36
      %s38 = ssub.s32 %s25, %s32
      %s39 = sor.u32 %s37, %s38
      %p40 = scmp.eq.s32.totalorder %s39, 0
      %s42 = sadd.s32 %s41, 1
      %s43 = scalar_select %p40, %s41, %s42
      %p46 = pneg %p40
      %p47 = scmp.eq.s32.totalorder %s17, 1
      %p48 = por %p46, %p47
      %p49 = scmp.ne.s32.totalorder %s41, %s44
      %p50 = scmp.eq.s32.totalorder %s17, 0
      %p51 = por %p49, %p50
      %p52 = scmp.ne.s32.totalorder %s41, %s44
      %p53 = scmp.eq.s32.totalorder %s22, 1
      %p54 = por %p52, %p53
      %p55 = scmp.ne.s32.totalorder %s44, %s45
      %p56 = scmp.eq.s32.totalorder %s22, 0
      %p57 = por %p55, %p56
      %p58 = scmp.ne.s32.totalorder %s44, %s45
      %p59 = scmp.eq.s32.totalorder %s23, 1
      %p60 = por %p58, %p59
      %p62 = scmp.ne.s32.totalorder %s45, %s61
      %p63 = scmp.eq.s32.totalorder %s23, 0
      %p64 = por %p62, %p63
      %s65 = ssub.s32 %s24, %s36
      %s66 = ssub.s32 %s25, %s32
      %s67 = sor.u32 %s65, %s66
      %p68 = scmp.eq.s32.totalorder %s67, 0
      %s70 = sadd.s32 %s69, 1
      %s71 = scalar_select %p68, %s69, %s70
      %p74 = pneg %p68
      %p75 = scmp.eq.s32.totalorder %s17, 1
      %p76 = por %p74, %p75
      %p77 = scmp.ne.s32.totalorder %s69, %s72
      %p78 = scmp.eq.s32.totalorder %s17, 0
      %p79 = por %p77, %p78
      %p80 = scmp.ne.s32.totalorder %s69, %s72
      %p81 = scmp.eq.s32.totalorder %s22, 1
      %p82 = por %p80, %p81
      %p83 = scmp.ne.s32.totalorder %s72, %s73
      %p84 = scmp.eq.s32.totalorder %s22, 0
      %p85 = por %p83, %p84
      %p86 = scmp.ne.s32.totalorder %s72, %s73
      %p87 = scmp.eq.s32.totalorder %s23, 1
      %p88 = por %p86, %p87
      %p90 = scmp.ne.s32.totalorder %s73, %s89
      %p91 = scmp.eq.s32.totalorder %s23, 0
      %p92 = por %p90, %p91
      %s94 = sadd.s32 %s93, 1
      %p97 = scmp.eq.s32.totalorder %s17, 1
      %p98 = scmp.ne.s32.totalorder %s93, %s95
      %p99 = scmp.eq.s32.totalorder %s17, 0
      %p100 = por %p98, %p99
      %p101 = scmp.ne.s32.totalorder %s93, %s95
      %p102 = scmp.eq.s32.totalorder %s22, 1
      %p103 = por %p101, %p102
      %p104 = scmp.ne.s32.totalorder %s95, %s96
      %p105 = scmp.eq.s32.totalorder %s22, 0
      %p106 = por %p104, %p105
      %p107 = scmp.ne.s32.totalorder %s95, %s96
      %p108 = scmp.eq.s32.totalorder %s23, 1
      %p109 = por %p107, %p108
      %p111 = scmp.ne.s32.totalorder %s96, %s110
      %p112 = scmp.eq.s32.totalorder %s23, 0
      %p113 = por %p111, %p112
      %s114 = ssub.s32 %s25, %s32
      %p115 = scmp.eq.s32.totalorder %s114, 0
      %s117 = sadd.s32 %s116, 1
      %s118 = scalar_select %p115, %s116, %s117
      %p121 = pneg %p115
      %p122 = scmp.eq.s32.totalorder %s17, 1
      %p123 = por %p121, %p122
      %p124 = scmp.ne.s32.totalorder %s116, %s119
      %p125 = scmp.eq.s32.totalorder %s17, 0
      %p126 = por %p124, %p125
      %p127 = scmp.ne.s32.totalorder %s116, %s119
      %p128 = scmp.eq.s32.totalorder %s22, 1
      %p129 = por %p127, %p128
      %p130 = scmp.ne.s32.totalorder %s119, %s120
      %p131 = scmp.eq.s32.totalorder %s22, 0
      %p132 = por %p130, %p131
      %p133 = scmp.ne.s32.totalorder %s119, %s120
      %p134 = scmp.eq.s32.totalorder %s23, 1
      %p135 = por %p133, %p134
      %p137 = scmp.ne.s32.totalorder %s120, %s136
      %p138 = scmp.eq.s32.totalorder %s23, 0
      %p139 = por %p137, %p138
      %s141 = sadd.s32 %s140, 1
      %p144 = scmp.eq.s32.totalorder %s17, 1
      %p145 = scmp.ne.s32.totalorder %s140, %s142
      %p146 = scmp.eq.s32.totalorder %s17, 0
      %p147 = por %p145, %p146
      %p148 = scmp.ne.s32.totalorder %s140, %s142
      %p149 = scmp.eq.s32.totalorder %s22, 1
      %p150 = por %p148, %p149
      %p151 = scmp.ne.s32.totalorder %s142, %s143
      %p152 = scmp.eq.s32.totalorder %s22, 0
      %p153 = por %p151, %p152
      %p154 = scmp.ne.s32.totalorder %s142, %s143
      %p155 = scmp.eq.s32.totalorder %s23, 1
      %p156 = por %p154, %p155
      %p158 = scmp.ne.s32.totalorder %s143, %s157
      %p159 = scmp.eq.s32.totalorder %s23, 0
      %p160 = por %p158, %p159
      %s162 = sadd.s32 %s161, 1
      %p165 = scmp.eq.s32.totalorder %s17, 1
      %p166 = scmp.ne.s32.totalorder %s161, %s163
      %p167 = scmp.eq.s32.totalorder %s17, 0
      %p168 = por %p166, %p167
      %p169 = scmp.ne.s32.totalorder %s161, %s163
      %p170 = scmp.eq.s32.totalorder %s22, 1
      %p171 = por %p169, %p170
      %p172 = scmp.ne.s32.totalorder %s163, %s164
      %p173 = scmp.eq.s32.totalorder %s22, 0
      %p174 = por %p172, %p173
      %p175 = scmp.ne.s32.totalorder %s163, %s164
      %p176 = scmp.eq.s32.totalorder %s23, 1
      %p177 = por %p175, %p176
      %p179 = scmp.ne.s32.totalorder %s164, %s178
      %p180 = scmp.eq.s32.totalorder %s23, 0
      %p181 = por %p179, %p180
      %s182 = ssub.s32 %s24, %s36
      %s183 = ssub.s32 %s25, %s32
      %s184 = sor.u32 %s182, %s183
      %p185 = scmp.eq.s32.totalorder %s184, 0
      %s187 = sadd.s32 %s186, 1
      %s188 = scalar_select %p185, %s186, %s187
      %p191 = pneg %p185
      %p192 = scmp.eq.s32.totalorder %s17, 1
      %p193 = por %p191, %p192
      %p194 = scmp.ne.s32.totalorder %s186, %s189
      %p195 = scmp.eq.s32.totalorder %s17, 0
      %p196 = por %p194, %p195
      %p197 = scmp.ne.s32.totalorder %s186, %s189
      %p198 = scmp.eq.s32.totalorder %s22, 1
      %p199 = por %p197, %p198
      %p200 = scmp.ne.s32.totalorder %s189, %s190
      %p201 = scmp.eq.s32.totalorder %s22, 0
      %p202 = por %p200, %p201
      %p203 = scmp.ne.s32.totalorder %s189, %s190
      %p204 = scmp.eq.s32.totalorder %s23, 1
      %p205 = por %p203, %p204
      %p207 = scmp.ne.s32.totalorder %s190, %s206
      %p208 = scmp.eq.s32.totalorder %s23, 0
      %p209 = por %p207, %p208
      %s210 = ssub.s32 %s24, %s36
      %s211 = ssub.s32 %s25, %s32
      %s212 = sor.u32 %s210, %s211
      %p213 = scmp.eq.s32.totalorder %s212, 0
      %s215 = sadd.s32 %s214, 1
      %s216 = scalar_select %p213, %s214, %s215
      %p219 = pneg %p213
      %p220 = scmp.eq.s32.totalorder %s17, 1
      %p221 = por %p219, %p220
      %p222 = scmp.ne.s32.totalorder %s214, %s217
      %p223 = scmp.eq.s32.totalorder %s17, 0
      %p224 = por %p222, %p223
      %p225 = scmp.ne.s32.totalorder %s214, %s217
      %p226 = scmp.eq.s32.totalorder %s22, 1
      %p227 = por %p225, %p226
      %p228 = scmp.ne.s32.totalorder %s217, %s218
      %p229 = scmp.eq.s32.totalorder %s22, 0
      %p230 = por %p228, %p229
      %p231 = scmp.ne.s32.totalorder %s217, %s218
      %p232 = scmp.eq.s32.totalorder %s23, 1
      %p233 = por %p231, %p232
      %p235 = scmp.ne.s32.totalorder %s218, %s234
      %p236 = scmp.eq.s32.totalorder %s23, 0
      %p237 = por %p235, %p236
      %p238 = scmp.le.s32.totalorder 1, %s17
      %p239 = scmp.lt.s32.totalorder %s17, 3
      %p240 = pnand %p238, %p239
      %p241 = pneg %p240
      // Predicated region
      $region9: #{tpu_custom_call.1} parent=5 // pred_check
        _
      $region10: #{tpu_custom_call.1} parent=5 // pred_check_branch
        %243 = sbr.rel (%p240) target = $region12
      $region11: #{tpu_custom_call.1} parent=5 // pred_region
        %s244 = ssub.s32 %s17, 1
        // Predicated region
        $region13: #{tpu_custom_call.1} parent=11 // pred_check
          %p245 = pneg %p106
        $region14: #{tpu_custom_call.1} parent=11 // pred_check_branch
          %247 = sbr.rel (%p245) target = $region16
        $region15: #{tpu_custom_call.1} parent=11 // pred_region
          _
        $region16: #{tpu_custom_call.1} parent=11 // pred_fallthru
          _
        // Predicated region
        $region17: #{tpu_custom_call.1} parent=11 // pred_check
          %p248 = pneg %p132
        $region18: #{tpu_custom_call.1} parent=11 // pred_check_branch
          %250 = sbr.rel (%p248) target = $region20
        $region19: #{tpu_custom_call.1} parent=11 // pred_region
          %p251 = scmp.lt.s32.totalorder %s27, 0
          %s252 = scalar_select %p251, %s27, 0
          %s253 = smul.addr %s252, 4
          %s254 = scalar_lea.vmem %s3, %s253
        $region20: #{tpu_custom_call.1} parent=11 // pred_fallthru
          _
        // Predicated region
        $region21: #{tpu_custom_call.1} parent=11 // pred_check
          %p255 = pneg %p153
        $region22: #{tpu_custom_call.1} parent=11 // pred_check_branch
          %257 = sbr.rel (%p255) target = $region24
        $region23: #{tpu_custom_call.1} parent=11 // pred_region
          _
        $region24: #{tpu_custom_call.1} parent=11 // pred_fallthru
          _
        // Predicated region
        $region25: #{tpu_custom_call.1} parent=11 // pred_check
          %p258 = pneg %p174
        $region26: #{tpu_custom_call.1} parent=11 // pred_check_branch
          %260 = sbr.rel (%p258) target = $region28
        $region27: #{tpu_custom_call.1} parent=11 // pred_region
          _
        $region28: #{tpu_custom_call.1} parent=11 // pred_fallthru
          _
      $region12: #{tpu_custom_call.1} parent=5 // pred_fallthru
        _
      %p261 = scmp.lt.s32.totalorder %s17, 2
      // Predicated region
      $region29: #{tpu_custom_call.1} parent=5 // pred_check
        %p262 = pneg %p261
      $region30: #{tpu_custom_call.1} parent=5 // pred_check_branch
        %264 = sbr.rel (%p262) target = $region32
      $region31: #{tpu_custom_call.1} parent=5 // pred_region
        // Predicated region
        $region33: #{tpu_custom_call.1} parent=31 // pred_check
          %p265 = pneg %p51
        $region34: #{tpu_custom_call.1} parent=31 // pred_check_branch
          %267 = sbr.rel (%p265) target = $region36
        $region35: #{tpu_custom_call.1} parent=31 // pred_region
          %p268 = scmp.lt.s32.totalorder %s24, 1
          %s269 = scalar_select %p268, %s24, 1
          %p270 = scmp.lt.s32.totalorder %s25, 0
          %s271 = scalar_select %p270, %s25, 0
          %s272 = sadd.s32 %s271, %s269
          %s273 = smul.addr %s272, 8
          %s274 = scalar_lea.vmem %s0, %s273
        $region36: #{tpu_custom_call.1} parent=31 // pred_fallthru
          _
        // Predicated region
        $region37: #{tpu_custom_call.1} parent=31 // pred_check
          %p275 = pneg %p79
        $region38: #{tpu_custom_call.1} parent=31 // pred_check_branch
          %277 = sbr.rel (%p275) target = $region40
        $region39: #{tpu_custom_call.1} parent=31 // pred_region
          %p278 = scmp.lt.s32.totalorder %s24, 1
          %s279 = scalar_select %p278, %s24, 1
          %p280 = scmp.lt.s32.totalorder %s25, 0
          %s281 = scalar_select %p280, %s25, 0
          %s282 = sadd.s32 %s281, %s279
          %s283 = smul.addr %s282, 8
          %s284 = scalar_lea.vmem %s1, %s283
        $region40: #{tpu_custom_call.1} parent=31 // pred_fallthru
          _
      $region32: #{tpu_custom_call.1} parent=5 // pred_fallthru
        _
      %p285 = scmp.le.s32.totalorder 1, %s17
      %p286 = scmp.lt.s32.totalorder %s17, 3
      %p287 = pnand %p285, %p286
      %p288 = pneg %p287
      // Predicated region
      $region41: #{tpu_custom_call.1} parent=5 // pred_check
        _
      $region42: #{tpu_custom_call.1} parent=5 // pred_check_branch
        %290 = sbr.rel (%p287) target = $region44
      $region43: #{tpu_custom_call.1} parent=5 // pred_region
        %s291 = ssub.s32 %s17, 1
        %p292 = scmp.lt.s32.totalorder %s26, 1
        %s293 = scalar_select %p292, %s26, 1
        %p294 = scmp.lt.s32.totalorder %s27, 0
        %s295 = scalar_select %p294, %s27, 0
        %s296 = sadd.s32 %s295, %s293
        %s297 = smul.addr %s296, 8
        %s298 = scalar_lea.vmem %s0, %s297
        %p299 = pneg %p57
        %p300 = pneg %p54
        %p301 = scmp.lt.s32.totalorder %s26, 1
        %s302 = scalar_select %p301, %s26, 1
        %p303 = scmp.lt.s32.totalorder %s27, 0
        %s304 = scalar_select %p303, %s27, 0
        %s305 = sadd.s32 %s304, %s302
        %s306 = smul.addr %s305, 8
        %s307 = scalar_lea.vmem %s1, %s306
        %p308 = pneg %p85
        %p309 = pneg %p82
        %p310 = pneg %p106
        %p311 = pneg %p103
        %p312 = scmp.lt.s32.totalorder %s27, 0
        %s313 = scalar_select %p312, %s27, 0
        %s314 = smul.addr %s313, 4
        %s315 = scalar_lea.vmem %s3, %s314
        %p316 = pneg %p132
        %p317 = pneg %p129
        %p318 = pneg %p153
        %p319 = pneg %p150
        %p320 = pneg %p174
        %p321 = pneg %p171
        %p322 = pneg %p202
        %p323 = pneg %p199
        %s324 = sand.u32 %s189, 1
        %s325 = scalar_lea.sflag [#allocation3], %s324
        %s326 = sand.u32 %s189, 1
        %s327 = smul.addr %s326, 8
        %s328 = scalar_lea.vmem [#allocation2], %s327
        %p329 = pneg %p230
        %p330 = pneg %p227
        %p331 = scmp.lt.s32.totalorder %s26, 1
        %s332 = scalar_select %p331, %s26, 1
        %p333 = scmp.lt.s32.totalorder %s27, 0
        %s334 = scalar_select %p333, %s27, 0
        %s335 = sadd.s32 %s334, %s332
        %s336 = smul.addr %s335, 8
        %s337 = scalar_lea.vmem %s7, %s336
        %p338 = scmp.lt.s32.totalorder %s26, 1
        %s339 = scalar_select %p338, %s26, 1
        %p340 = scmp.lt.s32.totalorder %s27, 0
        %s341 = scalar_select %p340, %s27, 0
        %s342 = sadd.s32 %s341, %s339
        %s343 = smul.addr %s342, 8
        %s344 = scalar_lea.vmem %s0, %s343
        %p345 = scmp.lt.s32.totalorder %s26, 1
        %s346 = scalar_select %p345, %s26, 1
        %p347 = scmp.lt.s32.totalorder %s27, 0
        %s348 = scalar_select %p347, %s27, 0
        %s349 = sadd.s32 %s348, %s346
        %s350 = smul.addr %s349, 8
        %s351 = scalar_lea.vmem %s1, %s350
        %p352 = scmp.lt.s32.totalorder %s27, 0
        %s353 = scalar_select %p352, %s27, 0
        %s354 = smul.addr %s353, 4
        %s355 = scalar_lea.vmem %s3, %s354
        %p356 = scmp.lt.s32.totalorder %s26, 1
        %s357 = scalar_select %p356, %s26, 1
        %p358 = scmp.lt.s32.totalorder %s27, 0
        %s359 = scalar_select %p358, %s27, 0
        %s360 = sadd.s32 %s359, %s357
        %s361 = smul.addr %s360, 8
        %s362 = scalar_lea.vmem %s7, %s361
        %v364 = vld [vmem:[%s344] sm:$0xff]
        %v365 = vlaneseq
        %v366 = vand.u32 %v365, 127
        %367 = vset.pattern.permute.xlu0 0
        %368 = vperm.xlu0 %367, %v364
        %v369 = vpop.permute.xlu0 %368
        %vm370 = vcmp.eq.s32.totalorder %v369, %v366
        %v371 = vsel %vm370, 1, 0
        %v372 = vcvt.s32.f32 %v371
        %v373 = vpack.c.bf16 %v372, %v372
        %v374 = vld [vmem:[%s2] sm:$0xf]
        %v375 = vld [vmem:[%s2 + $0x4] sm:$0xf]
        %v376 = vld [vmem:[%s2 + $0x8] sm:$0xf]
        %v377 = vld [vmem:[%s2 + $0xc] sm:$0xf]
        %v378 = vld [vmem:[%s2 + $0x10] sm:$0xf]
        %v379 = vld [vmem:[%s2 + $0x14] sm:$0xf]
        %v380 = vld [vmem:[%s2 + $0x18] sm:$0xf]
        %v381 = vld [vmem:[%s2 + $0x1c] sm:$0xf]
        %v382 = vld [vmem:[%s2 + $0x20] sm:$0xf]
        %v383 = vld [vmem:[%s2 + $0x24] sm:$0xf]
        %v384 = vld [vmem:[%s2 + $0x28] sm:$0xf]
        %v385 = vld [vmem:[%s2 + $0x2c] sm:$0xf]
        %v386 = vld [vmem:[%s2 + $0x30] sm:$0xf]
        %v387 = vld [vmem:[%s2 + $0x34] sm:$0xf]
        %v388 = vld [vmem:[%s2 + $0x38] sm:$0xf]
        %v389 = vld [vmem:[%s2 + $0x3c] sm:$0xf]
        %v390 = vld [vmem:[%s355] sm:$0xf]
        %v391 = vunpack.c.l.bf16 %v390
        %v408 = vunpack.c.l.b16 %v374
        %v409 = vunpack.c.l.b16 %v375
        %v410 = vunpack.c.l.b16 %v376
        %v411 = vunpack.c.l.b16 %v377
        %v412 = vunpack.c.l.b16 %v378
        %v413 = vunpack.c.l.b16 %v379
        %v414 = vunpack.c.l.b16 %v380
        %v415 = vunpack.c.l.b16 %v381
        %v416 = vunpack.c.l.b16 %v382
        %v417 = vunpack.c.l.b16 %v383
        %v418 = vunpack.c.l.b16 %v384
        %v419 = vunpack.c.l.b16 %v385
        %v420 = vunpack.c.l.b16 %v386
        %v421 = vunpack.c.l.b16 %v387
        %v422 = vunpack.c.l.b16 %v388
        %v423 = vunpack.c.l.b16 %v389
        %v424 = vpack.c.b16 %v409, %v408
        %v425 = vpack.c.b16 %v411, %v410
        %v426 = vpack.c.b16 %v413, %v412
        %v427 = vpack.c.b16 %v415, %v414
        %v428 = vpack.c.b16 %v417, %v416
        %v429 = vpack.c.b16 %v419, %v418
        %v430 = vpack.c.b16 %v421, %v420
        %v431 = vpack.c.b16 %v423, %v422
        %440 = vmatprep.subr.bf16.mxu0 0
        %441 = vmatpush1.bf16.msra.mxu0 %v424
        %442 = vmatprep.subr.bf16.mxu0 0
        %443 = vmatpush1.bf16.msra.mxu0 %v425
        %444 = vmatprep.subr.bf16.mxu0 0
        %445 = vmatpush1.bf16.msra.mxu0 %v426
        %446 = vmatprep.subr.bf16.mxu0 0
        %447 = vmatpush1.bf16.msra.mxu0 %v427
        %448 = vmatprep.subr.bf16.mxu0 0
        %449 = vmatpush1.bf16.msra.mxu0 %v428
        %450 = vmatprep.subr.bf16.mxu0 0
        %451 = vmatpush1.bf16.msra.mxu0 %v429
        %452 = vmatprep.subr.bf16.mxu0 0
        %453 = vmatpush1.bf16.msra.mxu0 %v430
        %454 = vmatprep.subr.bf16.mxu0 0
        %455 = vmatpush1.bf16.msra.mxu0 %v431
        %456 = vmatprep.subr.bf16.mxu0 0
        %457 = vmatpush1.bf16.msra.mxu0 0
        %458 = vmatprep.subr.bf16.mxu0 0
        %459 = vmatpush1.bf16.msra.mxu0 0
        %460 = vmatprep.subr.bf16.mxu0 0
        %461 = vmatpush1.bf16.msra.mxu0 0
        %462 = vmatprep.subr.bf16.mxu0 0
        %463 = vmatpush1.bf16.msra.mxu0 0
        %464 = vmatprep.subr.bf16.mxu0 0
        %465 = vmatpush1.bf16.msra.mxu0 0
        %466 = vmatprep.subr.bf16.mxu0 0
        %467 = vmatpush1.bf16.msra.mxu0 0
        %468 = vmatprep.subr.bf16.mxu0 0
        %469 = vmatpush1.bf16.msra.mxu0 0
        %470 = vmatprep.subr.bf16.mxu0 0
        %471 = vmatpush1.bf16.msra.mxu0 0
        %472 = vmatprep.mubr.bf16.mxu0 0
        %473 = vmatmul.mubr.bf16.gmra.mrb[0].mxu0 %v373
        %v474 = vpop.f32.mrb[0].mxu0
        %v475 = vadd.f32 %v391, %v474
        %v476 = vpop.f32.mrb[0].mxu0
        %v477 = vpop.f32.mrb[0].mxu0
        %v478 = vpop.f32.mrb[0].mxu0
        %479 = vdwg.mxu0
        %v480 = vpack.c.bf16 %v475, %v475
        %v481 = vld [vmem:[%s4] sm:$0xf]
        %v482 = vld [vmem:[%s4 + $0x4] sm:$0xf]
        %v483 = vld [vmem:[%s4 + $0x8] sm:$0xf]
        %v484 = vld [vmem:[%s4 + $0xc] sm:$0xf]
        %v485 = vld [vmem:[%s5] sm:$0x1]
        %v487 = vlaneseq
        %v488 = vshrl.u32 %v487, 7
        %v489 = vsub.s32 0, %v488
        %v490 = vrot.slane %v485, %v489
        %v496 = vunpack.c.l.b16 %v481
        %v497 = vunpack.c.l.b16 %v482
        %v498 = vunpack.c.l.b16 %v483
        %v499 = vunpack.c.l.b16 %v484
        %v500 = vpack.c.b16 %v497, %v496
        %v501 = vpack.c.b16 %v499, %v498
        %vm504 = vcmask 261120
        %v506 = vsel %vm504, %v480, 0
        %508 = vmatprep.subr.bf16.mxu0 0
        %509 = vmatpush1.bf16.msra.mxu0 %v500
        %510 = vmatprep.subr.bf16.mxu0 0
        %511 = vmatpush1.bf16.msra.mxu0 %v501
        %512 = vmatprep.subr.bf16.mxu0 0
        %513 = vmatpush1.bf16.msra.mxu0 0
        %514 = vmatprep.subr.bf16.mxu0 0
        %515 = vmatpush1.bf16.msra.mxu0 0
        %516 = vmatprep.subr.bf16.mxu0 0
        %517 = vmatpush1.bf16.msra.mxu0 0
        %518 = vmatprep.subr.bf16.mxu0 0
        %519 = vmatpush1.bf16.msra.mxu0 0
        %520 = vmatprep.subr.bf16.mxu0 0
        %521 = vmatpush1.bf16.msra.mxu0 0
        %522 = vmatprep.subr.bf16.mxu0 0
        %523 = vmatpush1.bf16.msra.mxu0 0
        %524 = vmatprep.subr.bf16.mxu0 0
        %525 = vmatpush1.bf16.msra.mxu0 0
        %526 = vmatprep.subr.bf16.mxu0 0
        %527 = vmatpush1.bf16.msra.mxu0 0
        %528 = vmatprep.subr.bf16.mxu0 0
        %529 = vmatpush1.bf16.msra.mxu0 0
        %530 = vmatprep.subr.bf16.mxu0 0
        %531 = vmatpush1.bf16.msra.mxu0 0
        %532 = vmatprep.subr.bf16.mxu0 0
        %533 = vmatpush1.bf16.msra.mxu0 0
        %534 = vmatprep.subr.bf16.mxu0 0
        %535 = vmatpush1.bf16.msra.mxu0 0
        %536 = vmatprep.subr.bf16.mxu0 0
        %537 = vmatpush1.bf16.msra.mxu0 0
        %538 = vmatprep.subr.bf16.mxu0 0
        %539 = vmatpush1.bf16.msra.mxu0 0
        %540 = vmatprep.mubr.bf16.mxu0 0
        %541 = vmatmul.mubr.bf16.gmra.mrb[0].mxu0 %v506
        %v542 = vpop.f32.mrb[0].mxu0
        %v543 = vadd.f32 %v490, %v542
        %v544 = vpop.f32.mrb[0].mxu0
        %v545 = vpop.f32.mrb[0].mxu0
        %v546 = vpop.f32.mrb[0].mxu0
        %547 = vdwg.mxu0
        %548 = vst [vmem:[%s328] sm:$0xff] %v543
        %v549 = vld [vmem:[%s351] sm:$0xff]
        %550 = vmax.xlane.f32.xlu0 %v543
        %v551 = vpop.xlane.xlu0 %550
        %v552 = vsub.f32 %v543, %v551
        %v553 = vmul.f32 %v552, 1.442695
        %v554 = vpow.pop %v553
        %555 = vadd.xlane.f32.xlu0 %v554
        %v556 = vpop.xlane.xlu0 %555
        %v557 = vlog2.pop %v556
        %v558 = vmul.f32 %v557, 0.6931472
        %v559 = vadd.f32 %v551, %v558
        %560 = vset.pattern.permute.xlu0 0
        %561 = vperm.xlu0 %560, %v549
        %v562 = vpop.permute.xlu0 %561
        %vm563 = vcmp.eq.s32.totalorder %v366, %v562
        %v564 = vsel %vm563, %v543, 0.0
        %565 = vadd.xlane.f32.xlu0 %v564
        %v566 = vpop.xlane.xlu0 %565
        %v567 = vsub.f32 %v559, %v566
        %vm568 = vcmask 7168
        %569 = vst.msk [vmem:[%s362] sm:$0xff] %vm568, %v567
        %s570 = sand.u32 %s189, 1
        %s571 = scalar_lea.sflag [#allocation3], %s570
        %s572 = sand.u32 %s189, 1
        %s573 = smul.addr %s572, 8
        %s574 = scalar_lea.vmem [#allocation2], %s573
        %p575 = scmp.lt.s32.totalorder %s26, 1
        %s576 = scalar_select %p575, %s26, 1
        %p577 = scmp.lt.s32.totalorder %s27, 0
        %s578 = scalar_select %p577, %s27, 0
        %s579 = sadd.s32 %s578, %s576
        %s580 = smul.addr %s579, 8
        %s581 = scalar_lea.vmem %s7, %s580
        // Predicated region
        $region45: #{tpu_custom_call.1} parent=43 // pred_check
          %p582 = pneg %p199
        $region46: #{tpu_custom_call.1} parent=43 // pred_check_branch
          %584 = sbr.rel (%p582) target = $region48
        $region47: #{tpu_custom_call.1} parent=43 // pred_region
          %s586 = ssub.s32 128, 128
          %587 = vsyncadd %s571, %s586
          %s588 = sadd.s32 %s27, %s26
          %s589 = smul.addr %s588, 128
          %s590 = scalar_lea.hbm %s6, %s589
          %s592 = sshll.u32 %s574, 4
          %s593 = int_to_ptr.vmem [resolvable:$true] %s592
          %595 = dma.vmem_to_hbm [thread:$0]  %s593, 128, %s590, %s571
        $region48: #{tpu_custom_call.1} parent=43 // pred_fallthru
          _
        // Predicated region
        $region49: #{tpu_custom_call.1} parent=43 // pred_check
          %p596 = pneg %p227
        $region50: #{tpu_custom_call.1} parent=43 // pred_check_branch
          %598 = sbr.rel (%p596) target = $region52
        $region51: #{tpu_custom_call.1} parent=43 // pred_region
          _
        $region52: #{tpu_custom_call.1} parent=43 // pred_fallthru
          _
      $region44: #{tpu_custom_call.1} parent=5 // pred_fallthru
        _
      %p599 = scmp.le.s32.totalorder 2, %s17
      // Predicated region
      $region53: #{tpu_custom_call.1} parent=5 // pred_check
        %p600 = pneg %p599
      $region54: #{tpu_custom_call.1} parent=5 // pred_check_branch
        %602 = sbr.rel (%p600) target = $region56
      $region55: #{tpu_custom_call.1} parent=5 // pred_region
        %s603 = ssub.s32 %s17, 2
        // Predicated region
        $region57: #{tpu_custom_call.1} parent=55 // pred_check
          %p604 = pneg %p205
        $region58: #{tpu_custom_call.1} parent=55 // pred_check_branch
          %606 = sbr.rel (%p604) target = $region60
        $region59: #{tpu_custom_call.1} parent=55 // pred_region
          %s607 = sand.u32 %s190, 1
          %s608 = scalar_lea.sflag [#allocation3], %s607
          %s609 = sand.u32 %s190, 1
          %s610 = smul.addr %s609, 8
          %s611 = scalar_lea.vmem [#allocation2], %s610
          %612 = dma.done %s608, 128
        $region60: #{tpu_custom_call.1} parent=55 // pred_fallthru
          _
        // Predicated region
        $region61: #{tpu_custom_call.1} parent=55 // pred_check
          %p613 = pneg %p233
        $region62: #{tpu_custom_call.1} parent=55 // pred_check_branch
          %615 = sbr.rel (%p613) target = $region64
        $region63: #{tpu_custom_call.1} parent=55 // pred_region
          %p616 = scmp.lt.s32.totalorder %s28, 1
          %s617 = scalar_select %p616, %s28, 1
          %p618 = scmp.lt.s32.totalorder %s29, 0
          %s619 = scalar_select %p618, %s29, 0
          %s620 = sadd.s32 %s619, %s617
          %s621 = smul.addr %s620, 8
          %s622 = scalar_lea.vmem %s7, %s621
        $region64: #{tpu_custom_call.1} parent=55 // pred_fallthru
          _
      $region56: #{tpu_custom_call.1} parent=5 // pred_fallthru
        _
    $region6: #{tpu_custom_call.1} parent=1 // loop_footer
      %s21 = sadd.s32 1, %s17
    $region7: #{tpu_custom_call.1} parent=1 // loop_footer_branch
      %16 = sbr.rel target = $region3
    $region8: #{tpu_custom_call.1} parent=1 // loop_exit
      _
    %623 = vsyncpa [#allocation3], 1
    %s624 = scalar_lea.sflag [#allocation3], 1
    %625 = vsyncpa %s624, 1

</llo_original>
